<compile_context>
chip_gen: v6e
topology: v6e:2x2x1
jax: 0.10.0
libtpu: 0.0.40
codegen_flags: <defaults>
</compile_context>

<pallas_src>
import functools

import jax
import jax.numpy as jnp
from jax import lax
from jax.experimental import pallas as pl
from jax.experimental.pallas import tpu as pltpu

EPS = 1e-5  # PyTorch BatchNorm2d default eps


def _dense_layer_kernel(x_ref, s1_ref, b1_ref, w1s_ref, b2_ref, w2s_ref,
                        mask_ref, o_ref, *, tap_shifts):
    """Fused BN1+ReLU1+conv1x1(+BN2 scale)+shift+ReLU2+conv3x3 for one image.

    Per grid step (one image), all tensors are channels-on-sublanes,
    spatial (S = H*W) on lanes:
      x_ref:    (Cin, S)          native NCHW flatten
      s1_ref:   (Cin, 1)          folded BN1 scale
      b1_ref:   (Cin, 1)          folded BN1 shift
      w1s_ref:  (Cmid, Cin)       1x1 conv weight with BN2 scale folded, bf16
      b2_ref:   (Cmid, 1)         folded BN2 shift
      w2s_ref:  (9*Cout, Cmid)    3x3 conv weight stacked tap-major, bf16
      mask_ref: (9, S)            per-tap 0/1 validity mask (== zero padding)
      o_ref:    (Cout, S)         output, already NCHW-flat
      tap_shifts: static tuple of 9 lane-roll amounts (one per tap)
    """
    Cout, S = o_ref.shape

    # ---- Stage 1: BN1 + ReLU1 (f32 VPU), then 1x1 conv on the MXU in bf16
    # with BN2's scale pre-folded into the weight; BN2 shift + ReLU2 in f32.
    h = jnp.maximum(x_ref[...] * s1_ref[...] + b1_ref[...], 0.0)       # (Cin, S)
    y1 = jnp.dot(w1s_ref[...], h.astype(jnp.bfloat16),
                 preferred_element_type=jnp.float32)                   # (Cmid, S)
    z = jnp.maximum(y1 + b2_ref[...], 0.0).astype(jnp.bfloat16)        # (Cmid, S)

    # ---- Stage 2: 3x3 conv (stride 1, padding 1).  One wide MXU matmul
    # produces all 9 tap responses; each tap is then shifted along the
    # flattened spatial axis (XLU roll) and edge-masked (VPU multiply by a
    # precomputed 0/1 mask, reproducing the zero padding) before accumulation.
    y2 = jnp.dot(w2s_ref[...], z, preferred_element_type=jnp.float32)  # (9*Cout, S)

    mask = mask_ref[...]                                               # (9, S)
    acc = jnp.zeros((Cout, S), jnp.float32)
    for t, shift in enumerate(tap_shifts):                             # static unroll
        yt = y2[t * Cout:(t + 1) * Cout, :]                            # (Cout, S)
        if shift != 0:
            yt = pltpu.roll(yt, shift, axis=1)
        acc = acc + yt * mask[t:t + 1, :]
    o_ref[...] = acc.astype(o_ref.dtype)


def dense_layer_forward(x_nchw, params):
    """Pallas implementation of _DenseLayer.forward (eval mode), NCHW boundary."""
    x = x_nchw.astype(jnp.float32)
    N, Cin, H, W = x.shape
    S = H * W

    w1 = params["w1_oihw"][:, :, 0, 0]          # (Cmid, Cin)
    w2 = params["w2_oihw"]                      # (Cout, Cmid, 3, 3)
    Cmid = w1.shape[0]
    Cout = w2.shape[0]

    # Fold BatchNorm running stats into per-channel scale/shift, and fold BN2's
    # scale into the 1x1 conv weight:  relu(bn2(w1 @ h)) == relu((s2*w1) @ h + b2).
    s1 = params["g1"] / jnp.sqrt(params["v1"] + EPS)
    b1 = params["b1"] - params["m1"] * s1
    s2 = params["g2"] / jnp.sqrt(params["v2"] + EPS)
    b2 = params["b2"] - params["m2"] * s2

    w1s = (w1 * s2[:, None]).astype(jnp.bfloat16)                      # (Cmid, Cin)
    # Tap-major stacked 3x3 weight: row (dh*3+dw)*Cout + co  <-  w2[co, :, dh, dw]
    w2s = jnp.transpose(w2, (2, 3, 0, 1)).reshape(9 * Cout, Cmid).astype(jnp.bfloat16)

    s1 = s1.reshape(Cin, 1).astype(jnp.float32)
    b1 = b1.reshape(Cin, 1).astype(jnp.float32)
    b2 = b2.reshape(Cmid, 1).astype(jnp.float32)

    # Per-tap spatial validity masks (conv2's zero padding=1) and the matching
    # lane-roll amounts on the flattened spatial axis.
    hh = jnp.arange(H)[:, None]
    ww = jnp.arange(W)[None, :]
    masks, tap_shifts = [], []
    for dh in range(3):
        for dw in range(3):
            oh, ow = dh - 1, dw - 1
            valid = ((hh + oh >= 0) & (hh + oh < H) &
                     (ww + ow >= 0) & (ww + ow < W))
            masks.append(valid.reshape(1, S))
            tap_shifts.append((-(oh * W + ow)) % S)
    tap_mask = jnp.concatenate(masks, axis=0).astype(jnp.float32)      # (9, S)

    kernel = functools.partial(_dense_layer_kernel, tap_shifts=tuple(tap_shifts))

    out = pl.pallas_call(
        kernel,
        out_shape=jax.ShapeDtypeStruct((N, Cout, S), jnp.float32),
        grid=(N,),
        in_specs=[
            pl.BlockSpec((pl.Squeezed(), Cin, S), lambda n: (n, 0, 0)),
            pl.BlockSpec((Cin, 1), lambda n: (0, 0)),
            pl.BlockSpec((Cin, 1), lambda n: (0, 0)),
            pl.BlockSpec((Cmid, Cin), lambda n: (0, 0)),
            pl.BlockSpec((Cmid, 1), lambda n: (0, 0)),
            pl.BlockSpec((9 * Cout, Cmid), lambda n: (0, 0)),
            pl.BlockSpec((9, S), lambda n: (0, 0)),
        ],
        out_specs=pl.BlockSpec((pl.Squeezed(), Cout, S), lambda n: (n, 0, 0)),
        compiler_params=pltpu.CompilerParams(
            dimension_semantics=("parallel",),
            vmem_limit_bytes=32 * 1024 * 1024),
    )(x.reshape(N, Cin, S), s1, b1, w1s, b2, w2s, tap_mask)

    return out.reshape(N, Cout, H, W)  # already NCHW — reshape only, no transpose


# ---------------------------- pure-JAX reference ----------------------------
def _ref_forward(x_nchw, p):
    def bn(x, g, b, m, v):
        inv = g / jnp.sqrt(v + EPS)
        return x * inv[None, :, None, None] + (b - m * inv)[None, :, None, None]

    h = jax.nn.relu(bn(x_nchw, p["g1"], p["b1"], p["m1"], p["v1"]))
    h = lax.conv_general_dilated(h, p["w1_oihw"], (1, 1), "VALID",
                                 dimension_numbers=("NCHW", "OIHW", "NCHW"))
    h = jax.nn.relu(bn(h, p["g2"], p["b2"], p["m2"], p["v2"]))
    h = lax.conv_general_dilated(h, p["w2_oihw"], (1, 1), ((1, 1), (1, 1)),
                                 dimension_numbers=("NCHW", "OIHW", "NCHW"))
    return h


if __name__ == "__main__":
    # Module hyper-parameters (small, consistent with _DenseLayer.__init__).
    num_input_features = 4
    growth_rate = 8
    bn_size = 4
    Cin = num_input_features
    Cmid = bn_size * growth_rate      # 32
    Cout = growth_rate                # 8
    N, H, W = 2, 16, 16

    key = jax.random.PRNGKey(0)
    ks = jax.random.split(key, 12)

    x = jax.random.normal(ks[0], (N, Cin, H, W), jnp.float32)  # NCHW input

    # Deterministic synthetic parameters (PyTorch shapes).
    w1_oihw = jax.random.normal(ks[1], (Cmid, Cin, 1, 1), jnp.float32) * 0.2
    w2_oihw = jax.random.normal(ks[2], (Cout, Cmid, 3, 3), jnp.float32) * 0.1
    g1 = jax.random.uniform(ks[3], (Cin,), jnp.float32, 0.5, 1.5)
    b1 = jax.random.normal(ks[4], (Cin,), jnp.float32) * 0.1
    m1 = jax.random.normal(ks[5], (Cin,), jnp.float32) * 0.1
    v1 = jax.random.uniform(ks[6], (Cin,), jnp.float32, 0.5, 1.5)
    g2 = jax.random.uniform(ks[7], (Cmid,), jnp.float32, 0.5, 1.5)
    b2 = jax.random.normal(ks[8], (Cmid,), jnp.float32) * 0.1
    m2 = jax.random.normal(ks[9], (Cmid,), jnp.float32) * 0.1
    v2 = jax.random.uniform(ks[10], (Cmid,), jnp.float32, 0.5, 1.5)

    params = {
        "w1_oihw": w1_oihw, "w2_oihw": w2_oihw,
        "g1": g1, "b1": b1, "m1": m1, "v1": v1,
        "g2": g2, "b2": b2, "m2": m2, "v2": v2,
    }

    out = jax.jit(functools.partial(dense_layer_forward, params=params))(x)
    out = jax.block_until_ready(out)

    ref = _ref_forward(x, params)
    assert out.shape == (N, Cout, H, W), out.shape
    # bf16 MXU operands (f32 accumulation) -> looser tolerance than pure f32.
    assert jnp.allclose(out, ref, rtol=2e-2, atol=3e-2), \
        float(jnp.max(jnp.abs(out - ref)))

    print("KERNEL_OK")
</pallas_src>

<mosaic_0001>
module attributes {stable_mosaic.version = 11 : i64} {
  func.func @_dense_layer_kernel(%arg0: i32, %arg1: memref<1x4x256xf32, #tpu.memory_space<vmem>>, %arg2: memref<4x1xf32, #tpu.memory_space<vmem>>, %arg3: memref<4x1xf32, #tpu.memory_space<vmem>>, %arg4: memref<32x4xbf16, #tpu.memory_space<vmem>>, %arg5: memref<32x1xf32, #tpu.memory_space<vmem>>, %arg6: memref<72x32xbf16, #tpu.memory_space<vmem>>, %arg7: memref<9x256xf32, #tpu.memory_space<vmem>>, %arg8: memref<1x8x256xf32, #tpu.memory_space<vmem>>) attributes {dimension_semantics = [#tpu.dimension_semantics<parallel>], iteration_bounds = array<i64: 2>, scalar_prefetch = 0 : i64, scratch_operands = 0 : i64, tpu.core_type = #tpu.core_type<tc>, window_params = [{transform_indices = @transform_0, window_bounds = array<i64: 1, 4, 256>}, {pipeline_mode = #tpu.pipeline_mode<synchronous>, transform_indices = @transform_1, window_bounds = array<i64: 4, 1>}, {pipeline_mode = #tpu.pipeline_mode<synchronous>, transform_indices = @transform_2, window_bounds = array<i64: 4, 1>}, {pipeline_mode = #tpu.pipeline_mode<synchronous>, transform_indices = @transform_3, window_bounds = array<i64: 32, 4>}, {pipeline_mode = #tpu.pipeline_mode<synchronous>, transform_indices = @transform_4, window_bounds = array<i64: 32, 1>}, {pipeline_mode = #tpu.pipeline_mode<synchronous>, transform_indices = @transform_5, window_bounds = array<i64: 72, 32>}, {pipeline_mode = #tpu.pipeline_mode<synchronous>, transform_indices = @transform_6, window_bounds = array<i64: 9, 256>}, {transform_indices = @transform_7, window_bounds = array<i64: 1, 8, 256>}]} {
    %c0 = arith.constant 0 : index
    %c0_0 = arith.constant 0 : index
    %c0_1 = arith.constant 0 : index
    %0 = vector.load %arg1[%c0, %c0_0, %c0_1] : memref<1x4x256xf32, #tpu.memory_space<vmem>>, vector<1x4x256xf32>
    %1 = vector.shape_cast %0 : vector<1x4x256xf32> to vector<4x256xf32>
    %c0_2 = arith.constant 0 : index
    %c0_3 = arith.constant 0 : index
    %2 = vector.load %arg2[%c0_2, %c0_3] : memref<4x1xf32, #tpu.memory_space<vmem>>, vector<4x1xf32>
    %3 = vector.broadcast %2 : vector<4x1xf32> to vector<4x256xf32>
    %4 = arith.mulf %1, %3 : vector<4x256xf32>
    %c0_4 = arith.constant 0 : index
    %c0_5 = arith.constant 0 : index
    %5 = vector.load %arg3[%c0_4, %c0_5] : memref<4x1xf32, #tpu.memory_space<vmem>>, vector<4x1xf32>
    %6 = vector.broadcast %5 : vector<4x1xf32> to vector<4x256xf32>
    %7 = arith.addf %4, %6 : vector<4x256xf32>
    %cst = arith.constant 0.000000e+00 : f32
    %8 = vector.broadcast %cst : f32 to vector<4x256xf32>
    %9 = arith.maximumf %7, %8 : vector<4x256xf32>
    %c0_6 = arith.constant 0 : index
    %c0_7 = arith.constant 0 : index
    %10 = vector.load %arg4[%c0_6, %c0_7] : memref<32x4xbf16, #tpu.memory_space<vmem>>, vector<32x4xbf16>
    %11 = arith.truncf %9 : vector<4x256xf32> to vector<4x256xbf16>
    %cst_8 = arith.constant dense<0.000000e+00> : vector<32x256xf32>
    %12 = tpu.matmul %10, %11, %cst_8 {dimension_numbers = #tpu.dot_dimension_numbers<[1], [0], [0], [1], [0, 0, 1, 1], [], []>} : vector<32x4xbf16>, vector<4x256xbf16>, vector<32x256xf32> -> vector<32x256xf32>
    %c0_9 = arith.constant 0 : index
    %c0_10 = arith.constant 0 : index
    %13 = vector.load %arg5[%c0_9, %c0_10] : memref<32x1xf32, #tpu.memory_space<vmem>>, vector<32x1xf32>
    %14 = vector.broadcast %13 : vector<32x1xf32> to vector<32x256xf32>
    %15 = arith.addf %12, %14 : vector<32x256xf32>
    %cst_11 = arith.constant 0.000000e+00 : f32
    %16 = vector.broadcast %cst_11 : f32 to vector<32x256xf32>
    %17 = arith.maximumf %15, %16 : vector<32x256xf32>
    %18 = arith.truncf %17 : vector<32x256xf32> to vector<32x256xbf16>
    %c0_12 = arith.constant 0 : index
    %c0_13 = arith.constant 0 : index
    %19 = vector.load %arg6[%c0_12, %c0_13] : memref<72x32xbf16, #tpu.memory_space<vmem>>, vector<72x32xbf16>
    %cst_14 = arith.constant dense<0.000000e+00> : vector<72x256xf32>
    %20 = tpu.matmul %19, %18, %cst_14 {dimension_numbers = #tpu.dot_dimension_numbers<[1], [0], [0], [1], [0, 0, 1, 1], [], []>} : vector<72x32xbf16>, vector<32x256xbf16>, vector<72x256xf32> -> vector<72x256xf32>
    %c0_15 = arith.constant 0 : index
    %c0_16 = arith.constant 0 : index
    %21 = vector.load %arg7[%c0_15, %c0_16] : memref<9x256xf32, #tpu.memory_space<vmem>>, vector<9x256xf32>
    %cst_17 = arith.constant 0.000000e+00 : f32
    %22 = vector.broadcast %cst_17 : f32 to vector<8x256xf32>
    %23 = vector.extract_strided_slice %20 {offsets = [0, 0], sizes = [8, 256], strides = [1, 1]} : vector<72x256xf32> to vector<8x256xf32>
    %c17_i32 = arith.constant 17 : i32
    %24 = tpu.dynamic_rotate %23 by %c17_i32 dim 1 : vector<8x256xf32>, i32 -> vector<8x256xf32>
    %25 = vector.extract_strided_slice %21 {offsets = [0, 0], sizes = [1, 256], strides = [1, 1]} : vector<9x256xf32> to vector<1x256xf32>
    %26 = vector.broadcast %25 : vector<1x256xf32> to vector<8x256xf32>
    %27 = arith.mulf %24, %26 : vector<8x256xf32>
    %28 = arith.addf %22, %27 : vector<8x256xf32>
    %29 = vector.extract_strided_slice %20 {offsets = [8, 0], sizes = [8, 256], strides = [1, 1]} : vector<72x256xf32> to vector<8x256xf32>
    %c16_i32 = arith.constant 16 : i32
    %30 = tpu.dynamic_rotate %29 by %c16_i32 dim 1 : vector<8x256xf32>, i32 -> vector<8x256xf32>
    %31 = vector.extract_strided_slice %21 {offsets = [1, 0], sizes = [1, 256], strides = [1, 1]} : vector<9x256xf32> to vector<1x256xf32>
    %32 = vector.broadcast %31 : vector<1x256xf32> to vector<8x256xf32>
    %33 = arith.mulf %30, %32 : vector<8x256xf32>
    %34 = arith.addf %28, %33 : vector<8x256xf32>
    %35 = vector.extract_strided_slice %20 {offsets = [16, 0], sizes = [8, 256], strides = [1, 1]} : vector<72x256xf32> to vector<8x256xf32>
    %c15_i32 = arith.constant 15 : i32
    %36 = tpu.dynamic_rotate %35 by %c15_i32 dim 1 : vector<8x256xf32>, i32 -> vector<8x256xf32>
    %37 = vector.extract_strided_slice %21 {offsets = [2, 0], sizes = [1, 256], strides = [1, 1]} : vector<9x256xf32> to vector<1x256xf32>
    %38 = vector.broadcast %37 : vector<1x256xf32> to vector<8x256xf32>
    %39 = arith.mulf %36, %38 : vector<8x256xf32>
    %40 = arith.addf %34, %39 : vector<8x256xf32>
    %41 = vector.extract_strided_slice %20 {offsets = [24, 0], sizes = [8, 256], strides = [1, 1]} : vector<72x256xf32> to vector<8x256xf32>
    %c1_i32 = arith.constant 1 : i32
    %42 = tpu.dynamic_rotate %41 by %c1_i32 dim 1 : vector<8x256xf32>, i32 -> vector<8x256xf32>
    %43 = vector.extract_strided_slice %21 {offsets = [3, 0], sizes = [1, 256], strides = [1, 1]} : vector<9x256xf32> to vector<1x256xf32>
    %44 = vector.broadcast %43 : vector<1x256xf32> to vector<8x256xf32>
    %45 = arith.mulf %42, %44 : vector<8x256xf32>
    %46 = arith.addf %40, %45 : vector<8x256xf32>
    %47 = vector.extract_strided_slice %20 {offsets = [32, 0], sizes = [8, 256], strides = [1, 1]} : vector<72x256xf32> to vector<8x256xf32>
    %48 = vector.extract_strided_slice %21 {offsets = [4, 0], sizes = [1, 256], strides = [1, 1]} : vector<9x256xf32> to vector<1x256xf32>
    %49 = vector.broadcast %48 : vector<1x256xf32> to vector<8x256xf32>
    %50 = arith.mulf %47, %49 : vector<8x256xf32>
    %51 = arith.addf %46, %50 : vector<8x256xf32>
    %52 = vector.extract_strided_slice %20 {offsets = [40, 0], sizes = [8, 256], strides = [1, 1]} : vector<72x256xf32> to vector<8x256xf32>
    %c255_i32 = arith.constant 255 : i32
    %53 = tpu.dynamic_rotate %52 by %c255_i32 dim 1 : vector<8x256xf32>, i32 -> vector<8x256xf32>
    %54 = vector.extract_strided_slice %21 {offsets = [5, 0], sizes = [1, 256], strides = [1, 1]} : vector<9x256xf32> to vector<1x256xf32>
    %55 = vector.broadcast %54 : vector<1x256xf32> to vector<8x256xf32>
    %56 = arith.mulf %53, %55 : vector<8x256xf32>
    %57 = arith.addf %51, %56 : vector<8x256xf32>
    %58 = vector.extract_strided_slice %20 {offsets = [48, 0], sizes = [8, 256], strides = [1, 1]} : vector<72x256xf32> to vector<8x256xf32>
    %c241_i32 = arith.constant 241 : i32
    %59 = tpu.dynamic_rotate %58 by %c241_i32 dim 1 : vector<8x256xf32>, i32 -> vector<8x256xf32>
    %60 = vector.extract_strided_slice %21 {offsets = [6, 0], sizes = [1, 256], strides = [1, 1]} : vector<9x256xf32> to vector<1x256xf32>
    %61 = vector.broadcast %60 : vector<1x256xf32> to vector<8x256xf32>
    %62 = arith.mulf %59, %61 : vector<8x256xf32>
    %63 = arith.addf %57, %62 : vector<8x256xf32>
    %64 = vector.extract_strided_slice %20 {offsets = [56, 0], sizes = [8, 256], strides = [1, 1]} : vector<72x256xf32> to vector<8x256xf32>
    %c240_i32 = arith.constant 240 : i32
    %65 = tpu.dynamic_rotate %64 by %c240_i32 dim 1 : vector<8x256xf32>, i32 -> vector<8x256xf32>
    %66 = vector.extract_strided_slice %21 {offsets = [7, 0], sizes = [1, 256], strides = [1, 1]} : vector<9x256xf32> to vector<1x256xf32>
    %67 = vector.broadcast %66 : vector<1x256xf32> to vector<8x256xf32>
    %68 = arith.mulf %65, %67 : vector<8x256xf32>
    %69 = arith.addf %63, %68 : vector<8x256xf32>
    %70 = vector.extract_strided_slice %20 {offsets = [64, 0], sizes = [8, 256], strides = [1, 1]} : vector<72x256xf32> to vector<8x256xf32>
    %c239_i32 = arith.constant 239 : i32
    %71 = tpu.dynamic_rotate %70 by %c239_i32 dim 1 : vector<8x256xf32>, i32 -> vector<8x256xf32>
    %72 = vector.extract_strided_slice %21 {offsets = [8, 0], sizes = [1, 256], strides = [1, 1]} : vector<9x256xf32> to vector<1x256xf32>
    %73 = vector.broadcast %72 : vector<1x256xf32> to vector<8x256xf32>
    %74 = arith.mulf %71, %73 : vector<8x256xf32>
    %75 = arith.addf %69, %74 : vector<8x256xf32>
    %c0_18 = arith.constant 0 : index
    %c0_19 = arith.constant 0 : index
    %c0_20 = arith.constant 0 : index
    %76 = vector.load %arg8[%c0_18, %c0_19, %c0_20] : memref<1x8x256xf32, #tpu.memory_space<vmem>>, vector<1x8x256xf32>
    %77 = vector.shape_cast %76 : vector<1x8x256xf32> to vector<8x256xf32>
    %78 = vector.shape_cast %75 : vector<8x256xf32> to vector<1x8x256xf32>
    tpu.vector_store %arg8[%c0_18, %c0_19, %c0_20], %78 {strides = array<i32>} : memref<1x8x256xf32, #tpu.memory_space<vmem>>, vector<1x8x256xf32>,
    return
  }
  func.func @transform_0(%arg0: i32) -> (i32, i32, i32) {
    %c0_i32 = arith.constant 0 : i32
    %c0_i32_0 = arith.constant 0 : i32
    %c0_i32_1 = arith.constant 0 : i32
    return %arg0, %c0_i32, %c0_i32_0 : i32, i32, i32
  }
  func.func @transform_1(%arg0: i32) -> (i32, i32) {
    %c0_i32 = arith.constant 0 : i32
    %c0_i32_0 = arith.constant 0 : i32
    %c0_i32_1 = arith.constant 0 : i32
    return %c0_i32, %c0_i32_0 : i32, i32
  }
  func.func @transform_2(%arg0: i32) -> (i32, i32) {
    %c0_i32 = arith.constant 0 : i32
    %c0_i32_0 = arith.constant 0 : i32
    %c0_i32_1 = arith.constant 0 : i32
    return %c0_i32, %c0_i32_0 : i32, i32
  }
  func.func @transform_3(%arg0: i32) -> (i32, i32) {
    %c0_i32 = arith.constant 0 : i32
    %c0_i32_0 = arith.constant 0 : i32
    %c0_i32_1 = arith.constant 0 : i32
    return %c0_i32, %c0_i32_0 : i32, i32
  }
  func.func @transform_4(%arg0: i32) -> (i32, i32) {
    %c0_i32 = arith.constant 0 : i32
    %c0_i32_0 = arith.constant 0 : i32
    %c0_i32_1 = arith.constant 0 : i32
    return %c0_i32, %c0_i32_0 : i32, i32
  }
  func.func @transform_5(%arg0: i32) -> (i32, i32) {
    %c0_i32 = arith.constant 0 : i32
    %c0_i32_0 = arith.constant 0 : i32
    %c0_i32_1 = arith.constant 0 : i32
    return %c0_i32, %c0_i32_0 : i32, i32
  }
  func.func @transform_6(%arg0: i32) -> (i32, i32) {
    %c0_i32 = arith.constant 0 : i32
    %c0_i32_0 = arith.constant 0 : i32
    %c0_i32_1 = arith.constant 0 : i32
    return %c0_i32, %c0_i32_0 : i32, i32
  }
  func.func @transform_7(%arg0: i32) -> (i32, i32, i32) {
    %c0_i32 = arith.constant 0 : i32
    %c0_i32_0 = arith.constant 0 : i32
    %c0_i32_1 = arith.constant 0 : i32
    return %arg0, %c0_i32, %c0_i32_0 : i32, i32, i32
  }
}

</mosaic_0001>

<llo_original>
// kernel: dense_layer_forward.1
$region0: #{dense_layer_forward.1}
  #allocation0 [shape = 'u32[]', space=smem, size = 0x4, offset = 0x4, fixed_abs, tag = 'smem constant byte address 0x4 - core index']
  #allocation1 [shape = 'u32[144,128]{1,0:T(1,128)}', space=vmem, size = 0x12000, scoped, tag = 'internal scratch']
  %s0 = inlined_call_operand.vmem [shape: f32[2,4,256], index: 0, kind: input, shape index: {}]
  %s1 = inlined_call_operand.vmem [shape: f32[4,1], index: 1, kind: input, shape index: {}]
  %s2 = inlined_call_operand.vmem [shape: f32[4,1], index: 2, kind: input, shape index: {}]
  %s3 = inlined_call_operand.vmem [shape: bf16[32,4], index: 3, kind: input, shape index: {}]
  %s4 = inlined_call_operand.vmem [shape: f32[32,1], index: 4, kind: input, shape index: {}]
  %s5 = inlined_call_operand.vmem [shape: bf16[72,32], index: 5, kind: input, shape index: {}]
  %s6 = inlined_call_operand.vmem [shape: f32[9,256], index: 6, kind: input, shape index: {}]
  %s7 = inlined_call_operand.vmem [shape: f32[2,8,256], index: 7, kind: output, shape index: {}]
  %s8 = sld [smem:[#allocation0]]
  $region61: #{dense_layer_forward.1} parent=0
    _
  %s10 = ssub.s32 1, %s8
  %s11 = scalar_select 0, %s10, %s8
  loop: start=0, step=1, limit=4
  $region2: #{dense_layer_forward.1} parent=0 // loop_pre_header
    _
  $region3: #{dense_layer_forward.1} parent=0 // loop_header
    %s13 = sphi 0, %s17
    %p14 = scmp.ge.s32.totalorder %s13, 4
    %s23 = sphi 0, %s25
    %s26 = sphi 0, %s23
    %s27 = sphi 0, %s26
    %s43 = sphi 0, %s27
    %s47 = sphi 0, %s47
    %s49 = sphi 0, %s47
    %s50 = sphi 0, %s49
    %s64 = sphi 0, %s50
    %s68 = sphi 0, %s68
    %s70 = sphi 0, %s68
    %s71 = sphi 0, %s70
    %s85 = sphi 0, %s71
    %s89 = sphi 0, %s89
    %s91 = sphi 0, %s89
    %s92 = sphi 0, %s91
    %s106 = sphi 0, %s92
    %s110 = sphi 0, %s110
    %s112 = sphi 0, %s110
    %s113 = sphi 0, %s112
    %s127 = sphi 0, %s113
    %s131 = sphi 0, %s131
    %s133 = sphi 0, %s131
    %s134 = sphi 0, %s133
    %s148 = sphi 0, %s134
    %s152 = sphi 0, %s152
    %s154 = sphi 0, %s152
    %s155 = sphi 0, %s154
    %s169 = sphi 0, %s155
    %s175 = sphi 0, %s177
    %s178 = sphi 0, %s175
    %s179 = sphi 0, %s178
    %s195 = sphi 0, %s179
  $region4: #{dense_layer_forward.1} parent=0 // loop_header_branch
    %16 = sbr.rel (%p14) target = $region8
  $region5: #{dense_layer_forward.1} parent=0 // loop_body
    %s18 = ssub.s32 %s13, 1
    %s19 = ssub.s32 %s13, 2
    %s20 = sadd.s32 %s13, 1
    %s21 = ssub.s32 %s13, %s20
    %p22 = scmp.eq.s32.totalorder %s21, 0
    %s24 = sadd.s32 %s23, 1
    %s25 = scalar_select %p22, %s23, %s24
    %p28 = pneg %p22
    %p29 = scmp.eq.s32.totalorder %s13, 1
    %p30 = por %p28, %p29
    %p31 = scmp.ne.s32.totalorder %s23, %s26
    %p32 = scmp.eq.s32.totalorder %s13, 0
    %p33 = por %p31, %p32
    %p34 = scmp.ne.s32.totalorder %s23, %s26
    %p35 = scmp.eq.s32.totalorder %s18, 1
    %p36 = por %p34, %p35
    %p37 = scmp.ne.s32.totalorder %s26, %s27
    %p38 = scmp.eq.s32.totalorder %s18, 0
    %p39 = por %p37, %p38
    %p40 = scmp.ne.s32.totalorder %s26, %s27
    %p41 = scmp.eq.s32.totalorder %s19, 1
    %p42 = por %p40, %p41
    %p44 = scmp.ne.s32.totalorder %s27, %s43
    %p45 = scmp.eq.s32.totalorder %s19, 0
    %p46 = por %p44, %p45
    %s48 = sadd.s32 %s47, 1
    %p51 = scmp.eq.s32.totalorder %s13, 1
    %p52 = scmp.ne.s32.totalorder %s47, %s49
    %p53 = scmp.eq.s32.totalorder %s13, 0
    %p54 = por %p52, %p53
    %p55 = scmp.ne.s32.totalorder %s47, %s49
    %p56 = scmp.eq.s32.totalorder %s18, 1
    %p57 = por %p55, %p56
    %p58 = scmp.ne.s32.totalorder %s49, %s50
    %p59 = scmp.eq.s32.totalorder %s18, 0
    %p60 = por %p58, %p59
    %p61 = scmp.ne.s32.totalorder %s49, %s50
    %p62 = scmp.eq.s32.totalorder %s19, 1
    %p63 = por %p61, %p62
    %p65 = scmp.ne.s32.totalorder %s50, %s64
    %p66 = scmp.eq.s32.totalorder %s19, 0
    %p67 = por %p65, %p66
    %s69 = sadd.s32 %s68, 1
    %p72 = scmp.eq.s32.totalorder %s13, 1
    %p73 = scmp.ne.s32.totalorder %s68, %s70
    %p74 = scmp.eq.s32.totalorder %s13, 0
    %p75 = por %p73, %p74
    %p76 = scmp.ne.s32.totalorder %s68, %s70
    %p77 = scmp.eq.s32.totalorder %s18, 1
    %p78 = por %p76, %p77
    %p79 = scmp.ne.s32.totalorder %s70, %s71
    %p80 = scmp.eq.s32.totalorder %s18, 0
    %p81 = por %p79, %p80
    %p82 = scmp.ne.s32.totalorder %s70, %s71
    %p83 = scmp.eq.s32.totalorder %s19, 1
    %p84 = por %p82, %p83
    %p86 = scmp.ne.s32.totalorder %s71, %s85
    %p87 = scmp.eq.s32.totalorder %s19, 0
    %p88 = por %p86, %p87
    %s90 = sadd.s32 %s89, 1
    %p93 = scmp.eq.s32.totalorder %s13, 1
    %p94 = scmp.ne.s32.totalorder %s89, %s91
    %p95 = scmp.eq.s32.totalorder %s13, 0
    %p96 = por %p94, %p95
    %p97 = scmp.ne.s32.totalorder %s89, %s91
    %p98 = scmp.eq.s32.totalorder %s18, 1
    %p99 = por %p97, %p98
    %p100 = scmp.ne.s32.totalorder %s91, %s92
    %p101 = scmp.eq.s32.totalorder %s18, 0
    %p102 = por %p100, %p101
    %p103 = scmp.ne.s32.totalorder %s91, %s92
    %p104 = scmp.eq.s32.totalorder %s19, 1
    %p105 = por %p103, %p104
    %p107 = scmp.ne.s32.totalorder %s92, %s106
    %p108 = scmp.eq.s32.totalorder %s19, 0
    %p109 = por %p107, %p108
    %s111 = sadd.s32 %s110, 1
    %p114 = scmp.eq.s32.totalorder %s13, 1
    %p115 = scmp.ne.s32.totalorder %s110, %s112
    %p116 = scmp.eq.s32.totalorder %s13, 0
    %p117 = por %p115, %p116
    %p118 = scmp.ne.s32.totalorder %s110, %s112
    %p119 = scmp.eq.s32.totalorder %s18, 1
    %p120 = por %p118, %p119
    %p121 = scmp.ne.s32.totalorder %s112, %s113
    %p122 = scmp.eq.s32.totalorder %s18, 0
    %p123 = por %p121, %p122
    %p124 = scmp.ne.s32.totalorder %s112, %s113
    %p125 = scmp.eq.s32.totalorder %s19, 1
    %p126 = por %p124, %p125
    %p128 = scmp.ne.s32.totalorder %s113, %s127
    %p129 = scmp.eq.s32.totalorder %s19, 0
    %p130 = por %p128, %p129
    %s132 = sadd.s32 %s131, 1
    %p135 = scmp.eq.s32.totalorder %s13, 1
    %p136 = scmp.ne.s32.totalorder %s131, %s133
    %p137 = scmp.eq.s32.totalorder %s13, 0
    %p138 = por %p136, %p137
    %p139 = scmp.ne.s32.totalorder %s131, %s133
    %p140 = scmp.eq.s32.totalorder %s18, 1
    %p141 = por %p139, %p140
    %p142 = scmp.ne.s32.totalorder %s133, %s134
    %p143 = scmp.eq.s32.totalorder %s18, 0
    %p144 = por %p142, %p143
    %p145 = scmp.ne.s32.totalorder %s133, %s134
    %p146 = scmp.eq.s32.totalorder %s19, 1
    %p147 = por %p145, %p146
    %p149 = scmp.ne.s32.totalorder %s134, %s148
    %p150 = scmp.eq.s32.totalorder %s19, 0
    %p151 = por %p149, %p150
    %s153 = sadd.s32 %s152, 1
    %p156 = scmp.eq.s32.totalorder %s13, 1
    %p157 = scmp.ne.s32.totalorder %s152, %s154
    %p158 = scmp.eq.s32.totalorder %s13, 0
    %p159 = por %p157, %p158
    %p160 = scmp.ne.s32.totalorder %s152, %s154
    %p161 = scmp.eq.s32.totalorder %s18, 1
    %p162 = por %p160, %p161
    %p163 = scmp.ne.s32.totalorder %s154, %s155
    %p164 = scmp.eq.s32.totalorder %s18, 0
    %p165 = por %p163, %p164
    %p166 = scmp.ne.s32.totalorder %s154, %s155
    %p167 = scmp.eq.s32.totalorder %s19, 1
    %p168 = por %p166, %p167
    %p170 = scmp.ne.s32.totalorder %s155, %s169
    %p171 = scmp.eq.s32.totalorder %s19, 0
    %p172 = por %p170, %p171
    %s173 = ssub.s32 %s13, %s20
    %p174 = scmp.eq.s32.totalorder %s173, 0
    %s176 = sadd.s32 %s175, 1
    %s177 = scalar_select %p174, %s175, %s176
    %p180 = pneg %p174
    %p181 = scmp.eq.s32.totalorder %s13, 1
    %p182 = por %p180, %p181
    %p183 = scmp.ne.s32.totalorder %s175, %s178
    %p184 = scmp.eq.s32.totalorder %s13, 0
    %p185 = por %p183, %p184
    %p186 = scmp.ne.s32.totalorder %s175, %s178
    %p187 = scmp.eq.s32.totalorder %s18, 1
    %p188 = por %p186, %p187
    %p189 = scmp.ne.s32.totalorder %s178, %s179
    %p190 = scmp.eq.s32.totalorder %s18, 0
    %p191 = por %p189, %p190
    %p192 = scmp.ne.s32.totalorder %s178, %s179
    %p193 = scmp.eq.s32.totalorder %s19, 1
    %p194 = por %p192, %p193
    %p196 = scmp.ne.s32.totalorder %s179, %s195
    %p197 = scmp.eq.s32.totalorder %s19, 0
    %p198 = por %p196, %p197
    %p199 = scmp.le.s32.totalorder 1, %s13
    %p200 = scmp.lt.s32.totalorder %s13, 3
    %p201 = pnand %p199, %p200
    %p202 = pneg %p201
    // Predicated region
    $region9: #{dense_layer_forward.1} parent=5 // pred_check
      _
    $region10: #{dense_layer_forward.1} parent=5 // pred_check_branch
      %204 = sbr.rel (%p201) target = $region12
    $region11: #{dense_layer_forward.1} parent=5 // pred_region
      %s205 = ssub.s32 %s13, 1
      // Predicated region
      $region13: #{dense_layer_forward.1} parent=11 // pred_check
        %p206 = pneg %p60
      $region14: #{dense_layer_forward.1} parent=11 // pred_check_branch
        %208 = sbr.rel (%p206) target = $region16
      $region15: #{dense_layer_forward.1} parent=11 // pred_region
        _
      $region16: #{dense_layer_forward.1} parent=11 // pred_fallthru
        _
      // Predicated region
      $region17: #{dense_layer_forward.1} parent=11 // pred_check
        %p209 = pneg %p81
      $region18: #{dense_layer_forward.1} parent=11 // pred_check_branch
        %211 = sbr.rel (%p209) target = $region20
      $region19: #{dense_layer_forward.1} parent=11 // pred_region
        _
      $region20: #{dense_layer_forward.1} parent=11 // pred_fallthru
        _
      // Predicated region
      $region21: #{dense_layer_forward.1} parent=11 // pred_check
        %p212 = pneg %p102
      $region22: #{dense_layer_forward.1} parent=11 // pred_check_branch
        %214 = sbr.rel (%p212) target = $region24
      $region23: #{dense_layer_forward.1} parent=11 // pred_region
        _
      $region24: #{dense_layer_forward.1} parent=11 // pred_fallthru
        _
      // Predicated region
      $region25: #{dense_layer_forward.1} parent=11 // pred_check
        %p215 = pneg %p123
      $region26: #{dense_layer_forward.1} parent=11 // pred_check_branch
        %217 = sbr.rel (%p215) target = $region28
      $region27: #{dense_layer_forward.1} parent=11 // pred_region
        _
      $region28: #{dense_layer_forward.1} parent=11 // pred_fallthru
        _
      // Predicated region
      $region29: #{dense_layer_forward.1} parent=11 // pred_check
        %p218 = pneg %p144
      $region30: #{dense_layer_forward.1} parent=11 // pred_check_branch
        %220 = sbr.rel (%p218) target = $region32
      $region31: #{dense_layer_forward.1} parent=11 // pred_region
        _
      $region32: #{dense_layer_forward.1} parent=11 // pred_fallthru
        _
      // Predicated region
      $region33: #{dense_layer_forward.1} parent=11 // pred_check
        %p221 = pneg %p165
      $region34: #{dense_layer_forward.1} parent=11 // pred_check_branch
        %223 = sbr.rel (%p221) target = $region36
      $region35: #{dense_layer_forward.1} parent=11 // pred_region
        _
      $region36: #{dense_layer_forward.1} parent=11 // pred_fallthru
        _
    $region12: #{dense_layer_forward.1} parent=5 // pred_fallthru
      _
    %p224 = scmp.lt.s32.totalorder %s13, 2
    // Predicated region
    $region37: #{dense_layer_forward.1} parent=5 // pred_check
      %p225 = pneg %p224
    $region38: #{dense_layer_forward.1} parent=5 // pred_check_branch
      %227 = sbr.rel (%p225) target = $region40
    $region39: #{dense_layer_forward.1} parent=5 // pred_region
      // Predicated region
      $region41: #{dense_layer_forward.1} parent=39 // pred_check
        %p228 = pneg %p33
      $region42: #{dense_layer_forward.1} parent=39 // pred_check_branch
        %230 = sbr.rel (%p228) target = $region44
      $region43: #{dense_layer_forward.1} parent=39 // pred_region
        %p231 = scmp.lt.s32.totalorder %s13, 1
        %s232 = scalar_select %p231, %s13, 1
        %s233 = smul.addr %s232, 2
        %s234 = smul.addr %s233, 4
        %s235 = scalar_lea.vmem %s0, %s234
      $region44: #{dense_layer_forward.1} parent=39 // pred_fallthru
        _
    $region40: #{dense_layer_forward.1} parent=5 // pred_fallthru
      _
    %p236 = scmp.le.s32.totalorder 1, %s13
    %p237 = scmp.lt.s32.totalorder %s13, 3
    %p238 = pnand %p236, %p237
    %p239 = pneg %p238
    // Predicated region
    $region45: #{dense_layer_forward.1} parent=5 // pred_check
      _
    $region46: #{dense_layer_forward.1} parent=5 // pred_check_branch
      %241 = sbr.rel (%p238) target = $region48
    $region47: #{dense_layer_forward.1} parent=5 // pred_region
      %s242 = ssub.s32 %s13, 1
      %p243 = scmp.lt.s32.totalorder %s18, 1
      %s244 = scalar_select %p243, %s18, 1
      %s245 = smul.addr %s244, 2
      %s246 = smul.addr %s245, 4
      %s247 = scalar_lea.vmem %s0, %s246
      %p248 = pneg %p39
      %p249 = pneg %p36
      %p250 = pneg %p60
      %p251 = pneg %p57
      %p252 = pneg %p81
      %p253 = pneg %p78
      %p254 = pneg %p102
      %p255 = pneg %p99
      %p256 = pneg %p123
      %p257 = pneg %p120
      %p258 = pneg %p144
      %p259 = pneg %p141
      %p260 = pneg %p165
      %p261 = pneg %p162
      %p262 = pneg %p191
      %p263 = pneg %p188
      %p264 = scmp.lt.s32.totalorder %s18, 1
      %s265 = scalar_select %p264, %s18, 1
      %s266 = smul.addr %s265, 2
      %s267 = smul.addr %s266, 8
      %s268 = scalar_lea.vmem %s7, %s267
      %p269 = scmp.lt.s32.totalorder %s18, 1
      %s270 = scalar_select %p269, %s18, 1
      %s271 = smul.addr %s270, 2
      %s272 = smul.addr %s271, 4
      %s273 = scalar_lea.vmem %s0, %s272
      %p274 = scmp.lt.s32.totalorder %s18, 1
      %s275 = scalar_select %p274, %s18, 1
      %s276 = smul.addr %s275, 2
      %s277 = smul.addr %s276, 8
      %s278 = scalar_lea.vmem %s7, %s277
      %v280 = vld [vmem:[%s273] sm:$0xff]
      %v281 = vld [vmem:[%s1] sm:$0xf]
      %283 = vset.pattern.permute.xlu0 0
      %284 = vperm.xlu0 %283, %v281
      %v285 = vpop.permute.xlu0 %284
      %v287 = vunpack.c.l.s4 839922192
      %v288 = vunpack.c.0.s8 %v287
      %v289 = vlaneseq
      %v290 = vshrl.u32 %v289, 7
      %v291 = vsub.s32 %v288, %v290
      %v292 = vrot.slane %v285, %v291
      %v294 = vmul.f32 %v280, %v292
      %v295 = vld [vmem:[%s2] sm:$0xf]
      %297 = vset.pattern.permute.xlu0 0
      %298 = vperm.xlu0 %297, %v295
      %v299 = vpop.permute.xlu0 %298
      %v301 = vunpack.c.l.s4 839922192
      %v302 = vunpack.c.0.s8 %v301
      %v303 = vlaneseq
      %v304 = vshrl.u32 %v303, 7
      %v305 = vsub.s32 %v302, %v304
      %v306 = vrot.slane %v299, %v305
      %v308 = vadd.f32 %v294, %v306
      %v309 = vmax.f32 %v308, 0.0
      %v310 = vld [vmem:[%s3] sm:$0xf]
      %v311 = vld [vmem:[%s3 + $0x4] sm:$0xf]
      %v312 = vld [vmem:[%s3 + $0x8] sm:$0xf]
      %v313 = vld [vmem:[%s3 + $0xc] sm:$0xf]
      %v315 = vcombine.high %v309, %v309
      %v317 = vpack.c.bf16 %v309, %v309
      %v318 = vpack.c.bf16 %v315, %v315
      %v319 = vld [vmem:[%s4] sm:$0xff]
      %v320 = vld [vmem:[%s4 + $0x8] sm:$0xff]
      %v321 = vld [vmem:[%s4 + $0x10] sm:$0xff]
      %v322 = vld [vmem:[%s4 + $0x18] sm:$0xff]
      %324 = vset.pattern.permute.xlu0 0
      %325 = vperm.xlu0 %324, %v319
      %v326 = vpop.permute.xlu0 %325
      %329 = vset.pattern.permute.xlu0 0
      %330 = vperm.xlu0 %329, %v320
      %v331 = vpop.permute.xlu0 %330
      %334 = vset.pattern.permute.xlu0 0
      %335 = vperm.xlu0 %334, %v321
      %v336 = vpop.permute.xlu0 %335
      %339 = vset.pattern.permute.xlu0 0
      %340 = vperm.xlu0 %339, %v322
      %v341 = vpop.permute.xlu0 %340
      %v347 = vunpack.c.l.b16 %v310
      %v348 = vunpack.c.l.b16 %v311
      %v349 = vunpack.c.l.b16 %v312
      %v350 = vunpack.c.l.b16 %v313
      %v351 = vpack.c.b16 %v348, %v347
      %v352 = vpack.c.b16 %v350, %v349
      %vm353 = vcmask 31744
      %v355 = vsel %vm353, %v351, 0
      %v358 = vsel %vm353, %v352, 0
      %vm360 = vcmask 1041408
      %v362 = vsel %vm360, %v317, 0
      %v365 = vsel %vm360, %v318, 0
      %367 = vmatprep.subr.bf16.mxu0 0
      %368 = vmatpush1.bf16.msra.mxu0 0
      %369 = vmatprep.subr.bf16.mxu0 0
      %370 = vmatpush1.bf16.msra.mxu0 0
      %371 = vmatprep.subr.bf16.mxu0 0
      %372 = vmatpush1.bf16.msra.mxu0 0
      %373 = vmatprep.subr.bf16.mxu0 0
      %374 = vmatpush1.bf16.msra.mxu0 0
      %375 = vmatprep.subr.bf16.mxu0 0
      %376 = vmatpush1.bf16.msra.mxu0 0
      %377 = vmatprep.subr.bf16.mxu0 0
      %378 = vmatpush1.bf16.msra.mxu0 0
      %379 = vmatprep.subr.bf16.mxu0 0
      %380 = vmatpush1.bf16.msra.mxu0 0
      %381 = vmatprep.subr.bf16.mxu0 %v365
      %382 = vmatpush1.bf16.msra.mxu0 %v362
      %383 = vmatprep.subr.bf16.mxu0 0
      %384 = vmatpush2.bf16.msra.mxu0 0
      %385 = vmatprep.subr.bf16.mxu0 0
      %386 = vmatpush2.bf16.msra.mxu0 0
      %387 = vmatprep.subr.bf16.mxu0 0
      %388 = vmatpush2.bf16.msra.mxu0 0
      %389 = vmatprep.subr.bf16.mxu0 0
      %390 = vmatpush2.bf16.msra.mxu0 0
      %391 = vmatprep.subr.bf16.mxu0 0
      %392 = vmatpush2.bf16.msra.mxu0 0
      %393 = vmatprep.subr.bf16.mxu0 0
      %394 = vmatpush2.bf16.msra.mxu0 0
      %395 = vmatprep.subr.bf16.mxu0 0
      %396 = vmatpush2.bf16.msra.mxu0 0
      %397 = vmatprep.subr.bf16.mxu0 0
      %398 = vmatpush2.bf16.msra.mxu0 0
      %399 = vmatprep.mubr.bf16.mxu0 0
      %400 = vmatmul.mubr.bf16.gmra.mxu0 %v355
      %v401 = vpop.f32.mrf.mxu0
      %v402 = vadd.f32 %v326, %v401
      %v403 = vpop.f32.mrf.mxu0
      %v404 = vadd.f32 %v326, %v403
      %v405 = vpop.f32.mrf.mxu0
      %v406 = vadd.f32 %v331, %v405
      %v407 = vpop.f32.mrf.mxu0
      %v408 = vadd.f32 %v331, %v407
      %409 = vmatprep.mubr.bf16.mxu0 0
      %410 = vmatmul.mubr.bf16.gmra.mxu0 %v358
      %v411 = vpop.f32.mrf.mxu0
      %v412 = vadd.f32 %v336, %v411
      %v413 = vpop.f32.mrf.mxu0
      %v414 = vadd.f32 %v336, %v413
      %v415 = vpop.f32.mrf.mxu0
      %v416 = vadd.f32 %v341, %v415
      %v417 = vpop.f32.mrf.mxu0
      %v418 = vadd.f32 %v341, %v417
      %419 = vdwg.mxu0
      %v420 = vmax.f32 %v402, 0.0
      %v421 = vmax.f32 %v404, 0.0
      %v422 = vmax.f32 %v406, 0.0
      %v423 = vmax.f32 %v408, 0.0
      %v424 = vmax.f32 %v412, 0.0
      %v425 = vmax.f32 %v414, 0.0
      %v426 = vmax.f32 %v416, 0.0
      %v427 = vmax.f32 %v418, 0.0
      %v428 = vpack.c.bf16 %v422, %v420
      %v429 = vpack.c.bf16 %v423, %v421
      %v430 = vpack.c.bf16 %v426, %v424
      %v431 = vpack.c.bf16 %v427, %v425
      %v432 = vld [vmem:[%s5] sm:$0xf]
      %v433 = vld [vmem:[%s5 + $0x4] sm:$0xf]
      %v434 = vld [vmem:[%s5 + $0x8] sm:$0xf]
      %v435 = vld [vmem:[%s5 + $0xc] sm:$0xf]
      %v436 = vld [vmem:[%s5 + $0x10] sm:$0xf]
      %v437 = vld [vmem:[%s5 + $0x14] sm:$0xf]
      %v438 = vld [vmem:[%s5 + $0x18] sm:$0xf]
      %v439 = vld [vmem:[%s5 + $0x1c] sm:$0xf]
      %v440 = vld [vmem:[%s5 + $0x20] sm:$0xf]
      %v450 = vunpack.c.l.b16 %v432
      %v451 = vunpack.c.l.b16 %v433
      %v452 = vunpack.c.l.b16 %v434
      %v453 = vunpack.c.l.b16 %v435
      %v454 = vunpack.c.l.b16 %v436
      %v455 = vunpack.c.l.b16 %v437
      %v456 = vunpack.c.l.b16 %v438
      %v457 = vunpack.c.l.b16 %v439
      %v458 = vunpack.c.l.b16 %v440
      %v459 = vpack.c.b16 %v451, %v450
      %v460 = vpack.c.b16 %v453, %v452
      %v461 = vpack.c.b16 %v455, %v454
      %v462 = vpack.c.b16 %v457, %v456
      %v463 = vpack.c.b16 %v458, %v458
      %vm464 = vcmask 261120
      %v466 = vsel %vm464, %v459, 0
      %v469 = vsel %vm464, %v460, 0
      %v472 = vsel %vm464, %v461, 0
      %v475 = vsel %vm464, %v462, 0
      %v478 = vsel %vm464, %v463, 0
      %480 = vmatprep.subr.bf16.mxu0 0
      %481 = vmatpush1.bf16.msra.mxu0 0
      %482 = vmatprep.subr.bf16.mxu0 0
      %483 = vmatpush1.bf16.msra.mxu0 0
      %484 = vmatprep.subr.bf16.mxu0 0
      %485 = vmatpush1.bf16.msra.mxu0 0
      %486 = vmatprep.subr.bf16.mxu0 0
      %487 = vmatpush1.bf16.msra.mxu0 0
      %488 = vmatprep.subr.bf16.mxu0 0
      %489 = vmatpush1.bf16.msra.mxu0 0
      %490 = vmatprep.subr.bf16.mxu0 0
      %491 = vmatpush1.bf16.msra.mxu0 0
      %492 = vmatprep.subr.bf16.mxu0 %v431
      %493 = vmatpush1.bf16.msra.mxu0 %v430
      %494 = vmatprep.subr.bf16.mxu0 %v429
      %495 = vmatpush1.bf16.msra.mxu0 %v428
      %496 = vmatprep.subr.bf16.mxu0 0
      %497 = vmatpush2.bf16.msra.mxu0 0
      %498 = vmatprep.subr.bf16.mxu0 0
      %499 = vmatpush2.bf16.msra.mxu0 0
      %500 = vmatprep.subr.bf16.mxu0 0
      %501 = vmatpush2.bf16.msra.mxu0 0
      %502 = vmatprep.subr.bf16.mxu0 0
      %503 = vmatpush2.bf16.msra.mxu0 0
      %504 = vmatprep.subr.bf16.mxu0 0
      %505 = vmatpush2.bf16.msra.mxu0 0
      %506 = vmatprep.subr.bf16.mxu0 0
      %507 = vmatpush2.bf16.msra.mxu0 0
      %508 = vmatprep.subr.bf16.mxu0 0
      %509 = vmatpush2.bf16.msra.mxu0 0
      %510 = vmatprep.subr.bf16.mxu0 0
      %511 = vmatpush2.bf16.msra.mxu0 0
      %512 = vmatprep.mubr.bf16.mxu0 0
      %513 = vmatmul.mubr.bf16.gmra.mxu0 %v466
      %v514 = vpop.f32.mrf.mxu0
      %v515 = vadd.f32 0.0, %v514
      %v516 = vpop.f32.mrf.mxu0
      %v517 = vadd.f32 0.0, %v516
      %v518 = vpop.f32.mrf.mxu0
      %v519 = vadd.f32 0.0, %v518
      %v520 = vpop.f32.mrf.mxu0
      %v521 = vadd.f32 0.0, %v520
      %522 = vmatprep.mubr.bf16.mxu0 0
      %523 = vmatmul.mubr.bf16.gmra.mxu0 %v469
      %v524 = vpop.f32.mrf.mxu0
      %v525 = vadd.f32 0.0, %v524
      %v526 = vpop.f32.mrf.mxu0
      %v527 = vadd.f32 0.0, %v526
      %v528 = vpop.f32.mrf.mxu0
      %v529 = vadd.f32 0.0, %v528
      %v530 = vpop.f32.mrf.mxu0
      %v531 = vadd.f32 0.0, %v530
      %532 = vmatprep.mubr.bf16.mxu0 0
      %533 = vmatmul.mubr.bf16.gmra.mxu0 %v472
      %v534 = vpop.f32.mrf.mxu0
      %v535 = vadd.f32 0.0, %v534
      %v536 = vpop.f32.mrf.mxu0
      %v537 = vadd.f32 0.0, %v536
      %v538 = vpop.f32.mrf.mxu0
      %v539 = vadd.f32 0.0, %v538
      %v540 = vpop.f32.mrf.mxu0
      %v541 = vadd.f32 0.0, %v540
      %542 = vmatprep.mubr.bf16.mxu0 0
      %543 = vmatmul.mubr.bf16.gmra.mxu0 %v475
      %v544 = vpop.f32.mrf.mxu0
      %v545 = vadd.f32 0.0, %v544
      %v546 = vpop.f32.mrf.mxu0
      %v547 = vadd.f32 0.0, %v546
      %v548 = vpop.f32.mrf.mxu0
      %v549 = vadd.f32 0.0, %v548
      %v550 = vpop.f32.mrf.mxu0
      %v551 = vadd.f32 0.0, %v550
      %552 = vmatprep.mubr.bf16.mxu0 0
      %553 = vmatmul.mubr.bf16.gmra.mxu0 %v478
      %v554 = vpop.f32.mrf.mxu0
      %v555 = vadd.f32 0.0, %v554
      %v556 = vpop.f32.mrf.mxu0
      %v557 = vadd.f32 0.0, %v556
      %v558 = vpop.f32.mrf.mxu0
      %v559 = vpop.f32.mrf.mxu0
      %560 = vdwg.mxu0
      %v561 = vld [vmem:[%s6] sm:$0xff]
      %v562 = vld [vmem:[%s6 + $0x8] sm:$0xff]
      %v563 = vld [vmem:[%s6 + $0x10] sm:$0x1]
      %v564 = vld [vmem:[%s6 + $0x18] sm:$0x1]
      %565 = vrot.lane.b32.xlu0 %v515, 17
      %v566 = vpop.permute.xlu0 %565
      %567 = vrot.lane.b32.xlu0 %v517, 17
      %v568 = vpop.permute.xlu0 %567
      %v569 = vlaneseq
      %v570 = vand.u32 %v569, 127
      %vm571 = vcmp.lt.s32.totalorder %v570, 17
      %v572 = vsel %vm571, %v566, %v568
      %v573 = vsel %vm571, %v568, %v566
      %v574 = vlaneseq
      %v575 = vshrl.u32 %v574, 7
      %v576 = vsub.s32 0, %v575
      %v577 = vrot.slane %v561, %v576
      %v578 = vlaneseq
      %v579 = vshrl.u32 %v578, 7
      %v580 = vsub.s32 0, %v579
      %v581 = vrot.slane %v562, %v580
      %v582 = vmul.f32 %v573, %v577
      %v583 = vmul.f32 %v572, %v581
      %v584 = vadd.f32 %v582, 0.0
      %v585 = vadd.f32 %v583, 0.0
      %586 = vrot.lane.b32.xlu0 %v519, 16
      %v587 = vpop.permute.xlu0 %586
      %588 = vrot.lane.b32.xlu0 %v521, 16
      %v589 = vpop.permute.xlu0 %588
      %vm590 = vcmp.lt.s32.totalorder %v570, 16
      %v591 = vsel %vm590, %v587, %v589
      %v592 = vsel %vm590, %v589, %v587
      %v593 = vlaneseq
      %v594 = vshrl.u32 %v593, 7
      %v595 = vsub.s32 1, %v594
      %v596 = vrot.slane %v561, %v595
      %v597 = vlaneseq
      %v598 = vshrl.u32 %v597, 7
      %v599 = vsub.s32 1, %v598
      %v600 = vrot.slane %v562, %v599
      %v601 = vmul.f32 %v592, %v596
      %v602 = vmul.f32 %v591, %v600
      %v603 = vadd.f32 %v584, %v601
      %v604 = vadd.f32 %v585, %v602
      %605 = vrot.lane.b32.xlu0 %v525, 15
      %v606 = vpop.permute.xlu0 %605
      %607 = vrot.lane.b32.xlu0 %v527, 15
      %v608 = vpop.permute.xlu0 %607
      %vm609 = vcmp.lt.s32.totalorder %v570, 15
      %v610 = vsel %vm609, %v606, %v608
      %v611 = vsel %vm609, %v608, %v606
      %v612 = vlaneseq
      %v613 = vshrl.u32 %v612, 7
      %v614 = vsub.s32 2, %v613
      %v615 = vrot.slane %v561, %v614
      %v616 = vlaneseq
      %v617 = vshrl.u32 %v616, 7
      %v618 = vsub.s32 2, %v617
      %v619 = vrot.slane %v562, %v618
      %v620 = vmul.f32 %v611, %v615
      %v621 = vmul.f32 %v610, %v619
      %v622 = vadd.f32 %v603, %v620
      %v623 = vadd.f32 %v604, %v621
      %624 = vrot.lane.b32.xlu0 %v529, 1
      %v625 = vpop.permute.xlu0 %624
      %626 = vrot.lane.b32.xlu0 %v531, 1
      %v627 = vpop.permute.xlu0 %626
      %vm628 = vcmp.lt.s32.totalorder %v570, 1
      %v629 = vsel %vm628, %v625, %v627
      %v630 = vsel %vm628, %v627, %v625
      %v631 = vlaneseq
      %v632 = vshrl.u32 %v631, 7
      %v633 = vsub.s32 3, %v632
      %v634 = vrot.slane %v561, %v633
      %v635 = vlaneseq
      %v636 = vshrl.u32 %v635, 7
      %v637 = vsub.s32 3, %v636
      %v638 = vrot.slane %v562, %v637
      %v639 = vmul.f32 %v630, %v634
      %v640 = vmul.f32 %v629, %v638
      %v641 = vadd.f32 %v622, %v639
      %v642 = vadd.f32 %v623, %v640
      %v643 = vlaneseq
      %v644 = vshrl.u32 %v643, 7
      %v645 = vsub.s32 4, %v644
      %v646 = vrot.slane %v561, %v645
      %v647 = vlaneseq
      %v648 = vshrl.u32 %v647, 7
      %v649 = vsub.s32 4, %v648
      %v650 = vrot.slane %v562, %v649
      %v651 = vmul.f32 %v535, %v646
      %v652 = vmul.f32 %v537, %v650
      %v653 = vadd.f32 %v641, %v651
      %v654 = vadd.f32 %v642, %v652
      %655 = vrot.lane.b32.xlu0 %v539, 127
      %v656 = vpop.permute.xlu0 %655
      %657 = vrot.lane.b32.xlu0 %v541, 127
      %v658 = vpop.permute.xlu0 %657
      %vm659 = vcmp.lt.s32.totalorder %v570, 127
      %v660 = vsel %vm659, %v656, %v658
      %v661 = vsel %vm659, %v658, %v656
      %v662 = vlaneseq
      %v663 = vshrl.u32 %v662, 7
      %v664 = vsub.s32 5, %v663
      %v665 = vrot.slane %v561, %v664
      %v666 = vlaneseq
      %v667 = vshrl.u32 %v666, 7
      %v668 = vsub.s32 5, %v667
      %v669 = vrot.slane %v562, %v668
      %v670 = vmul.f32 %v660, %v665
      %v671 = vmul.f32 %v661, %v669
      %v672 = vadd.f32 %v653, %v670
      %v673 = vadd.f32 %v654, %v671
      %674 = vrot.lane.b32.xlu0 %v545, 113
      %v675 = vpop.permute.xlu0 %674
      %676 = vrot.lane.b32.xlu0 %v547, 113
      %v677 = vpop.permute.xlu0 %676
      %vm678 = vcmp.lt.s32.totalorder %v570, 113
      %v679 = vsel %vm678, %v675, %v677
      %v680 = vsel %vm678, %v677, %v675
      %v681 = vlaneseq
      %v682 = vshrl.u32 %v681, 7
      %v683 = vsub.s32 6, %v682
      %v684 = vrot.slane %v561, %v683
      %v685 = vlaneseq
      %v686 = vshrl.u32 %v685, 7
      %v687 = vsub.s32 6, %v686
      %v688 = vrot.slane %v562, %v687
      %v689 = vmul.f32 %v679, %v684
      %v690 = vmul.f32 %v680, %v688
      %v691 = vadd.f32 %v672, %v689
      %v692 = vadd.f32 %v673, %v690
      %693 = vrot.lane.b32.xlu0 %v549, 112
      %v694 = vpop.permute.xlu0 %693
      %695 = vrot.lane.b32.xlu0 %v551, 112
      %v696 = vpop.permute.xlu0 %695
      %vm697 = vcmp.lt.s32.totalorder %v570, 112
      %v698 = vsel %vm697, %v694, %v696
      %v699 = vsel %vm697, %v696, %v694
      %v700 = vlaneseq
      %v701 = vshrl.u32 %v700, 7
      %v702 = vsub.s32 7, %v701
      %v703 = vrot.slane %v561, %v702
      %v704 = vlaneseq
      %v705 = vshrl.u32 %v704, 7
      %v706 = vsub.s32 7, %v705
      %v707 = vrot.slane %v562, %v706
      %v708 = vmul.f32 %v698, %v703
      %v709 = vmul.f32 %v699, %v707
      %v710 = vadd.f32 %v691, %v708
      %v711 = vadd.f32 %v692, %v709
      %712 = vrot.lane.b32.xlu0 %v555, 111
      %v713 = vpop.permute.xlu0 %712
      %714 = vrot.lane.b32.xlu0 %v557, 111
      %v715 = vpop.permute.xlu0 %714
      %vm716 = vcmp.lt.s32.totalorder %v570, 111
      %v717 = vsel %vm716, %v713, %v715
      %v718 = vsel %vm716, %v715, %v713
      %v719 = vlaneseq
      %v720 = vshrl.u32 %v719, 7
      %v721 = vsub.s32 0, %v720
      %v722 = vrot.slane %v563, %v721
      %v723 = vlaneseq
      %v724 = vshrl.u32 %v723, 7
      %v725 = vsub.s32 0, %v724
      %v726 = vrot.slane %v564, %v725
      %v727 = vmul.f32 %v717, %v722
      %v728 = vmul.f32 %v718, %v726
      %v729 = vadd.f32 %v710, %v727
      %v730 = vadd.f32 %v711, %v728
      %731 = vst [vmem:[%s278] sm:$0xff] %v729
      %732 = vst [vmem:[%s278 + $0x8] sm:$0xff] %v730
      %p733 = scmp.lt.s32.totalorder %s18, 1
      %s734 = scalar_select %p733, %s18, 1
      %s735 = smul.addr %s734, 2
      %s736 = smul.addr %s735, 8
      %s737 = scalar_lea.vmem %s7, %s736
      // Predicated region
      $region49: #{dense_layer_forward.1} parent=47 // pred_check
        %p738 = pneg %p188
      $region50: #{dense_layer_forward.1} parent=47 // pred_check_branch
        %740 = sbr.rel (%p738) target = $region52
      $region51: #{dense_layer_forward.1} parent=47 // pred_region
        _
      $region52: #{dense_layer_forward.1} parent=47 // pred_fallthru
        _
    $region48: #{dense_layer_forward.1} parent=5 // pred_fallthru
      _
    %p741 = scmp.le.s32.totalorder 2, %s13
    // Predicated region
    $region53: #{dense_layer_forward.1} parent=5 // pred_check
      %p742 = pneg %p741
    $region54: #{dense_layer_forward.1} parent=5 // pred_check_branch
      %744 = sbr.rel (%p742) target = $region56
    $region55: #{dense_layer_forward.1} parent=5 // pred_region
      %s745 = ssub.s32 %s13, 2
      // Predicated region
      $region57: #{dense_layer_forward.1} parent=55 // pred_check
        %p746 = pneg %p194
      $region58: #{dense_layer_forward.1} parent=55 // pred_check_branch
        %748 = sbr.rel (%p746) target = $region60
      $region59: #{dense_layer_forward.1} parent=55 // pred_region
        %p749 = scmp.lt.s32.totalorder %s19, 1
        %s750 = scalar_select %p749, %s19, 1
        %s751 = smul.addr %s750, 2
        %s752 = smul.addr %s751, 8
        %s753 = scalar_lea.vmem %s7, %s752
      $region60: #{dense_layer_forward.1} parent=55 // pred_fallthru
        _
    $region56: #{dense_layer_forward.1} parent=5 // pred_fallthru
      _
  $region6: #{dense_layer_forward.1} parent=0 // loop_footer
    %s17 = sadd.s32 1, %s13
  $region7: #{dense_layer_forward.1} parent=0 // loop_footer_branch
    %12 = sbr.rel target = $region3
  $region8: #{dense_layer_forward.1} parent=0 // loop_exit
    _

</llo_original>
